<compile_context>
chip_gen: v7x
topology: tpu7x:2x2x1
jax: 0.10.0
libtpu: 0.0.40
codegen_flags: <defaults>
</compile_context>

<pallas_src>
import jax
import jax.numpy as jnp
from jax.experimental import pallas as pl
from jax.experimental.pallas import tpu as pltpu

T = 30  # time steps (fixed by the module: nn.Linear(30, 30))


def _vmem_budget_bytes():
    """Generation-aware scoped-VMEM limit (v7x: 64 MiB/TC, v5e/v6e: 128 MiB)."""
    try:
        cap = pltpu.get_tpu_info().vmem_capacity_bytes
    except Exception:
        cap = 64 * 1024 * 1024  # conservative fallback (v7x)
    # Leave ~1/3 headroom for compiler scratch; never ask for more than 80 MiB.
    return int(min(cap * 2 // 3, 80 * 1024 * 1024))


def _target_block_bytes(vmem_limit):
    # ~2 MiB input blocks on 64 MiB-VMEM parts (v7x), ~4 MiB on 128 MiB parts.
    return 2 * 1024 * 1024 if vmem_limit <= 48 * 1024 * 1024 else 4 * 1024 * 1024


def _pick_col_tile(n_cols, itemsize, target_bytes):
    """Lane-tile (columns of the (T, B*F) slab) per grid step."""
    if n_cols < 128 or (n_cols % 128 != 0 and n_cols <= 512):
        # Narrow / awkward width: one full-width block.  Block dim == full array
        # dim satisfies the (8,128) BlockSpec rule.
        return int(n_cols)
    c = max(128, (target_bytes // (T * itemsize)) // 128 * 128)
    # Keep >= ~8 grid steps when possible (double-buffer overlap + both v7x TCs).
    c = min(c, max(128, (pl.cdiv(n_cols, 8) // 128) * 128))
    # Never exceed the 128-aligned portion of the array width.
    c = min(c, (n_cols // 128) * 128)
    return int(max(c, 128))


def _attention3d_kernel(x_ref, w_ref, b_ref, o_ref):
    # x_ref: (T, C)  lane-dense slab: columns = flattened (batch, feature)
    # w_ref: (T, T)  Linear weight (resident; constant index_map)
    # b_ref: (T, 1)  Linear bias
    # o_ref: (T, C)
    x = x_ref[...]

    # s[o, c] = sum_t W[o, t] * x[t, c]  -- one wide MXU matmul per block.
    s = jnp.dot(w_ref[...], x, preferred_element_type=jnp.float32)
    s = s + b_ref[...]                              # (T, 1) broadcast over lanes

    # Softmax over the linear-output axis (sublane axis) == output time axis.
    m = jnp.max(s, axis=0, keepdims=True)
    e = jnp.exp(s - m)
    d = jnp.sum(e, axis=0, keepdims=True)
    r = pl.reciprocal(d, approx=True)               # EUP vrcp (otherwise-idle slot)
    r = r * (2.0 - d * r)                           # one Newton step -> ~1e-6 rel err

    p = (e * r).astype(o_ref.dtype)                 # bf16 multiply when inputs are bf16
    o_ref[...] = (p * x).astype(o_ref.dtype)


def attention3d_block(inputs, weight, bias):
    """inputs: (B, T, F); weight: (T, T); bias: (T,) -> (B, T, F)."""
    B, t, F = inputs.shape
    assert t == T, f"time dim must be {T}, got {t}"
    dtype = inputs.dtype
    itemsize = jnp.dtype(dtype).itemsize
    n_cols = B * F

    vmem_limit = _vmem_budget_bytes()
    c = _pick_col_tile(n_cols, itemsize, _target_block_bytes(vmem_limit))
    grid = (pl.cdiv(n_cols, c),)

    # Layout plumbing: present a lane-dense (T, B*F) slab to the kernel.
    x2 = jnp.transpose(inputs, (1, 0, 2)).reshape(T, n_cols)
    bias2d = bias.reshape(T, 1).astype(jnp.float32)

    cost = pl.CostEstimate(
        flops=2 * B * T * T * F,
        transcendentals=B * T * F,
        bytes_accessed=2 * B * T * F * itemsize + T * T * 4 + T * 4,
    )

    out2 = pl.pallas_call(
        _attention3d_kernel,
        out_shape=jax.ShapeDtypeStruct((T, n_cols), dtype),
        grid_spec=pltpu.PrefetchScalarGridSpec(
            num_scalar_prefetch=0,
            grid=grid,
            in_specs=[
                pl.BlockSpec((T, c), lambda i: (0, i)),
                pl.BlockSpec((T, T), lambda i: (0, 0)),   # weight: fetched once, resident
                pl.BlockSpec((T, 1), lambda i: (0, 0)),   # bias: fetched once, resident
            ],
            out_specs=pl.BlockSpec((T, c), lambda i: (0, i)),
        ),
        compiler_params=pltpu.CompilerParams(
            dimension_semantics=("parallel",),
            vmem_limit_bytes=vmem_limit,
        ),
        cost_estimate=cost,
    )(x2, weight, bias2d)

    return jnp.transpose(out2.reshape(T, B, F), (1, 0, 2))


def _reference(inputs, weight, bias):
    # Pure-JAX reference mirroring the PyTorch forward.
    x = jnp.transpose(inputs, (0, 2, 1))                  # (B, F, T)
    x = jnp.einsum("bft,ot->bfo", x, weight) + bias       # Linear(30, 30)
    x = jax.nn.softmax(x, axis=2)
    x_probs = jnp.transpose(x, (0, 2, 1))                 # (B, T, F)
    return x_probs * inputs


if __name__ == "__main__":
    key = jax.random.PRNGKey(0)
    k1, k2, k3 = jax.random.split(key, 3)

    B, F = 4, 64   # B*F = 256 -> two 128-wide lane tiles, exercises the grid
    inputs = jax.random.normal(k1, (B, T, F), dtype=jnp.float32)

    # Deterministic parameter init (nn.Linear(30, 30) shapes).
    bound = 1.0 / jnp.sqrt(float(T))
    weight = jax.random.uniform(k2, (T, T), minval=-bound, maxval=bound,
                                dtype=jnp.float32)
    bias = jax.random.uniform(k3, (T,), minval=-bound, maxval=bound,
                              dtype=jnp.float32)

    out = attention3d_block(inputs, weight, bias)
    out = jax.block_until_ready(out)

    ref = _reference(inputs, weight, bias)
    assert out.shape == (B, T, F)
    assert jnp.allclose(out, ref, atol=1e-5, rtol=1e-5), "mismatch vs reference"

    print("KERNEL_OK")
</pallas_src>

<mosaic_0001>
module attributes {stable_mosaic.version = 11 : i64} {
  func.func @_attention3d_kernel(%arg0: i32, %arg1: memref<30x128xf32, #tpu.memory_space<vmem>>, %arg2: memref<30x30xf32, #tpu.memory_space<vmem>>, %arg3: memref<30x1xf32, #tpu.memory_space<vmem>>, %arg4: memref<30x128xf32, #tpu.memory_space<vmem>>) attributes {dimension_semantics = [#tpu.dimension_semantics<parallel>], iteration_bounds = array<i64: 2>, scalar_prefetch = 0 : i64, scratch_operands = 0 : i64, tpu.core_type = #tpu.core_type<tc>, window_params = [{transform_indices = @transform_0, window_bounds = array<i64: 30, 128>}, {pipeline_mode = #tpu.pipeline_mode<synchronous>, transform_indices = @transform_1, window_bounds = array<i64: 30, 30>}, {pipeline_mode = #tpu.pipeline_mode<synchronous>, transform_indices = @transform_2, window_bounds = array<i64: 30, 1>}, {transform_indices = @transform_3, window_bounds = array<i64: 30, 128>}]} {
    %c0 = arith.constant 0 : index
    %c0_0 = arith.constant 0 : index
    %0 = vector.load %arg1[%c0, %c0_0] : memref<30x128xf32, #tpu.memory_space<vmem>>, vector<30x128xf32>
    %c0_1 = arith.constant 0 : index
    %c0_2 = arith.constant 0 : index
    %1 = vector.load %arg2[%c0_1, %c0_2] : memref<30x30xf32, #tpu.memory_space<vmem>>, vector<30x30xf32>
    %cst = arith.constant dense<0.000000e+00> : vector<30x128xf32>
    %2 = tpu.matmul %1, %0, %cst {dimension_numbers = #tpu.dot_dimension_numbers<[1], [0], [0], [1], [0, 0, 1, 1], [], []>} : vector<30x30xf32>, vector<30x128xf32>, vector<30x128xf32> -> vector<30x128xf32>
    %c0_3 = arith.constant 0 : index
    %c0_4 = arith.constant 0 : index
    %3 = vector.load %arg3[%c0_3, %c0_4] : memref<30x1xf32, #tpu.memory_space<vmem>>, vector<30x1xf32>
    %4 = vector.broadcast %3 : vector<30x1xf32> to vector<30x128xf32>
    %5 = arith.addf %2, %4 : vector<30x128xf32>
    %cst_5 = arith.constant dense<0xFF800000> : vector<128xf32>
    %6 = vector.multi_reduction <maximumf>, %5, %cst_5 [0] : vector<30x128xf32> to vector<128xf32>
    %7 = vector.shape_cast %6 : vector<128xf32> to vector<1x128xf32>
    %8 = vector.broadcast %7 : vector<1x128xf32> to vector<30x128xf32>
    %9 = arith.subf %5, %8 : vector<30x128xf32>
    %10 = math.exp %9 : vector<30x128xf32>
    %cst_6 = arith.constant dense<0.000000e+00> : vector<128xf32>
    %11 = vector.multi_reduction <add>, %10, %cst_6 [0] : vector<30x128xf32> to vector<128xf32>
    %12 = vector.shape_cast %11 : vector<128xf32> to vector<1x128xf32>
    %13 = tpu.reciprocal %12 {approx = true} : vector<1x128xf32> -> vector<1x128xf32>
    %14 = arith.mulf %12, %13 : vector<1x128xf32>
    %cst_7 = arith.constant 2.000000e+00 : f32
    %15 = vector.broadcast %cst_7 : f32 to vector<1x128xf32>
    %16 = arith.subf %15, %14 : vector<1x128xf32>
    %17 = arith.mulf %13, %16 : vector<1x128xf32>
    %18 = vector.broadcast %17 : vector<1x128xf32> to vector<30x128xf32>
    %19 = arith.mulf %10, %18 : vector<30x128xf32>
    %20 = arith.mulf %19, %0 : vector<30x128xf32>
    %c0_8 = arith.constant 0 : index
    %c0_9 = arith.constant 0 : index
    %21 = vector.load %arg4[%c0_8, %c0_9] : memref<30x128xf32, #tpu.memory_space<vmem>>, vector<30x128xf32>
    tpu.vector_store %arg4[%c0_8, %c0_9], %20 {strides = array<i32>} : memref<30x128xf32, #tpu.memory_space<vmem>>, vector<30x128xf32>,
    return
  }
  func.func @transform_0(%arg0: i32) -> (i32, i32) {
    %c0_i32 = arith.constant 0 : i32
    %c0_i32_0 = arith.constant 0 : i32
    return %c0_i32, %arg0 : i32, i32
  }
  func.func @transform_1(%arg0: i32) -> (i32, i32) {
    %c0_i32 = arith.constant 0 : i32
    %c0_i32_0 = arith.constant 0 : i32
    %c0_i32_1 = arith.constant 0 : i32
    return %c0_i32, %c0_i32_0 : i32, i32
  }
  func.func @transform_2(%arg0: i32) -> (i32, i32) {
    %c0_i32 = arith.constant 0 : i32
    %c0_i32_0 = arith.constant 0 : i32
    %c0_i32_1 = arith.constant 0 : i32
    return %c0_i32, %c0_i32_0 : i32, i32
  }
  func.func @transform_3(%arg0: i32) -> (i32, i32) {
    %c0_i32 = arith.constant 0 : i32
    %c0_i32_0 = arith.constant 0 : i32
    return %c0_i32, %arg0 : i32, i32
  }
}

</mosaic_0001>

<llo_original>
// kernel: tpu_custom_call.1
$region0: #{tpu_custom_call.1}
  #allocation0 [shape = 'u32[]', space=smem, size = 0x4, offset = 0x4, fixed_abs, tag = 'smem constant byte address 0x4 - core index']
  #allocation1 [shape = 'u32[144,128]{1,0:T(1,128)}', space=vmem, size = 0x12000, scoped, tag = 'internal scratch']
  %s0 = inlined_call_operand.hbm [shape: f32[30,256], index: 0, kind: input, shape index: {}]
  %s1 = inlined_call_operand.vmem [shape: f32[30,30], index: 1, kind: input, shape index: {}]
  %s2 = inlined_call_operand.vmem [shape: f32[30,1], index: 2, kind: input, shape index: {}]
  %s3 = inlined_call_operand.hbm [shape: f32[30,256], index: 3, kind: output, shape index: {}]
  %s4 = sld [smem:[#allocation0]]
  $region49: #{tpu_custom_call.1} parent=0
    _
  %s6 = ssub.s32 1, %s4
  %s7 = scalar_select 0, %s6, %s4
  $region1: #{tpu_custom_call.1} parent=0
    #allocation2 [shape = 'u8[32768]{0}', space=vmem, size = 0x8000, scoped, tag = 'input window, operand 0']
    #allocation3 [shape = 's32[2]{0}', space=sflag, size = 0x8, scoped, tag = 'scoped memory for tpu_custom_call.1']
    #allocation4 [shape = 's32[2]{0}', space=sflag, size = 0x8, scoped, tag = 'scoped memory for tpu_custom_call.1']
    #allocation5 [shape = 'u8[32768]{0}', space=vmem, size = 0x8000, scoped, tag = 'output window, operand 0']
    %8 = vsyncpa [#allocation3], 0
    %s9 = scalar_lea.sflag [#allocation3], 1
    %10 = vsyncpa %s9, 0
    %11 = vsyncpa [#allocation4], 0
    %s12 = scalar_lea.sflag [#allocation4], 1
    %13 = vsyncpa %s12, 0
    loop: start=0, step=1, limit=4
    $region2: #{tpu_custom_call.1} parent=1 // loop_pre_header
      _
    $region3: #{tpu_custom_call.1} parent=1 // loop_header
      %s15 = sphi 0, %s19
      %p16 = scmp.ge.s32.totalorder %s15, 4
      %s25 = sphi 0, %s27
      %s28 = sphi 0, %s25
      %s29 = sphi 0, %s28
      %s45 = sphi 0, %s29
      %s49 = sphi 0, %s49
      %s51 = sphi 0, %s49
      %s52 = sphi 0, %s51
      %s66 = sphi 0, %s52
      %s70 = sphi 0, %s70
      %s72 = sphi 0, %s70
      %s73 = sphi 0, %s72
      %s87 = sphi 0, %s73
      %s93 = sphi 0, %s95
      %s96 = sphi 0, %s93
      %s97 = sphi 0, %s96
      %s113 = sphi 0, %s97
    $region4: #{tpu_custom_call.1} parent=1 // loop_header_branch
      %18 = sbr.rel (%p16) target = $region8
    $region5: #{tpu_custom_call.1} parent=1 // loop_body
      %s20 = ssub.s32 %s15, 1
      %s21 = ssub.s32 %s15, 2
      %s22 = sadd.s32 %s15, 1
      %s23 = ssub.s32 %s15, %s22
      %p24 = scmp.eq.s32.totalorder %s23, 0
      %s26 = sadd.s32 %s25, 1
      %s27 = scalar_select %p24, %s25, %s26
      %p30 = pneg %p24
      %p31 = scmp.eq.s32.totalorder %s15, 1
      %p32 = por %p30, %p31
      %p33 = scmp.ne.s32.totalorder %s25, %s28
      %p34 = scmp.eq.s32.totalorder %s15, 0
      %p35 = por %p33, %p34
      %p36 = scmp.ne.s32.totalorder %s25, %s28
      %p37 = scmp.eq.s32.totalorder %s20, 1
      %p38 = por %p36, %p37
      %p39 = scmp.ne.s32.totalorder %s28, %s29
      %p40 = scmp.eq.s32.totalorder %s20, 0
      %p41 = por %p39, %p40
      %p42 = scmp.ne.s32.totalorder %s28, %s29
      %p43 = scmp.eq.s32.totalorder %s21, 1
      %p44 = por %p42, %p43
      %p46 = scmp.ne.s32.totalorder %s29, %s45
      %p47 = scmp.eq.s32.totalorder %s21, 0
      %p48 = por %p46, %p47
      %s50 = sadd.s32 %s49, 1
      %p53 = scmp.eq.s32.totalorder %s15, 1
      %p54 = scmp.ne.s32.totalorder %s49, %s51
      %p55 = scmp.eq.s32.totalorder %s15, 0
      %p56 = por %p54, %p55
      %p57 = scmp.ne.s32.totalorder %s49, %s51
      %p58 = scmp.eq.s32.totalorder %s20, 1
      %p59 = por %p57, %p58
      %p60 = scmp.ne.s32.totalorder %s51, %s52
      %p61 = scmp.eq.s32.totalorder %s20, 0
      %p62 = por %p60, %p61
      %p63 = scmp.ne.s32.totalorder %s51, %s52
      %p64 = scmp.eq.s32.totalorder %s21, 1
      %p65 = por %p63, %p64
      %p67 = scmp.ne.s32.totalorder %s52, %s66
      %p68 = scmp.eq.s32.totalorder %s21, 0
      %p69 = por %p67, %p68
      %s71 = sadd.s32 %s70, 1
      %p74 = scmp.eq.s32.totalorder %s15, 1
      %p75 = scmp.ne.s32.totalorder %s70, %s72
      %p76 = scmp.eq.s32.totalorder %s15, 0
      %p77 = por %p75, %p76
      %p78 = scmp.ne.s32.totalorder %s70, %s72
      %p79 = scmp.eq.s32.totalorder %s20, 1
      %p80 = por %p78, %p79
      %p81 = scmp.ne.s32.totalorder %s72, %s73
      %p82 = scmp.eq.s32.totalorder %s20, 0
      %p83 = por %p81, %p82
      %p84 = scmp.ne.s32.totalorder %s72, %s73
      %p85 = scmp.eq.s32.totalorder %s21, 1
      %p86 = por %p84, %p85
      %p88 = scmp.ne.s32.totalorder %s73, %s87
      %p89 = scmp.eq.s32.totalorder %s21, 0
      %p90 = por %p88, %p89
      %s91 = ssub.s32 %s15, %s22
      %p92 = scmp.eq.s32.totalorder %s91, 0
      %s94 = sadd.s32 %s93, 1
      %s95 = scalar_select %p92, %s93, %s94
      %p98 = pneg %p92
      %p99 = scmp.eq.s32.totalorder %s15, 1
      %p100 = por %p98, %p99
      %p101 = scmp.ne.s32.totalorder %s93, %s96
      %p102 = scmp.eq.s32.totalorder %s15, 0
      %p103 = por %p101, %p102
      %p104 = scmp.ne.s32.totalorder %s93, %s96
      %p105 = scmp.eq.s32.totalorder %s20, 1
      %p106 = por %p104, %p105
      %p107 = scmp.ne.s32.totalorder %s96, %s97
      %p108 = scmp.eq.s32.totalorder %s20, 0
      %p109 = por %p107, %p108
      %p110 = scmp.ne.s32.totalorder %s96, %s97
      %p111 = scmp.eq.s32.totalorder %s21, 1
      %p112 = por %p110, %p111
      %p114 = scmp.ne.s32.totalorder %s97, %s113
      %p115 = scmp.eq.s32.totalorder %s21, 0
      %p116 = por %p114, %p115
      %p117 = scmp.le.s32.totalorder 1, %s15
      %p118 = scmp.lt.s32.totalorder %s15, 3
      %p119 = pnand %p117, %p118
      %p120 = pneg %p119
      // Predicated region
      $region9: #{tpu_custom_call.1} parent=5 // pred_check
        _
      $region10: #{tpu_custom_call.1} parent=5 // pred_check_branch
        %122 = sbr.rel (%p119) target = $region12
      $region11: #{tpu_custom_call.1} parent=5 // pred_region
        %s123 = ssub.s32 %s15, 1
        // Predicated region
        $region13: #{tpu_custom_call.1} parent=11 // pred_check
          %p124 = pneg %p62
        $region14: #{tpu_custom_call.1} parent=11 // pred_check_branch
          %126 = sbr.rel (%p124) target = $region16
        $region15: #{tpu_custom_call.1} parent=11 // pred_region
          _
        $region16: #{tpu_custom_call.1} parent=11 // pred_fallthru
          _
        // Predicated region
        $region17: #{tpu_custom_call.1} parent=11 // pred_check
          %p127 = pneg %p83
        $region18: #{tpu_custom_call.1} parent=11 // pred_check_branch
          %129 = sbr.rel (%p127) target = $region20
        $region19: #{tpu_custom_call.1} parent=11 // pred_region
          _
        $region20: #{tpu_custom_call.1} parent=11 // pred_fallthru
          _
      $region12: #{tpu_custom_call.1} parent=5 // pred_fallthru
        _
      %p130 = scmp.lt.s32.totalorder %s15, 2
      // Predicated region
      $region21: #{tpu_custom_call.1} parent=5 // pred_check
        %p131 = pneg %p130
      $region22: #{tpu_custom_call.1} parent=5 // pred_check_branch
        %133 = sbr.rel (%p131) target = $region24
      $region23: #{tpu_custom_call.1} parent=5 // pred_region
        // Predicated region
        $region25: #{tpu_custom_call.1} parent=23 // pred_check
          %p134 = pneg %p35
        $region26: #{tpu_custom_call.1} parent=23 // pred_check_branch
          %136 = sbr.rel (%p134) target = $region28
        $region27: #{tpu_custom_call.1} parent=23 // pred_region
          %s137 = sand.u32 %s25, 1
          %s138 = scalar_lea.sflag [#allocation3], %s137
          %s139 = sand.u32 %s25, 1
          %s140 = smul.addr %s139, 32
          %s141 = scalar_lea.vmem [#allocation2], %s140
          %s143 = ssub.s32 512, 512
          %144 = vsyncadd %s138, %s143
          %s145 = smul.addr %s15, 128
          %s146 = scalar_lea.hbm %s0, %s145
          %s147 = sshll.u32 %s141, 4
          %s148 = int_to_ptr.vmem [resolvable:$true] %s147
          %153 = dma.hbm_to_vmem [thread:$0]  %s146, 512, %s148, %s138, 256, 128, 8
        $region28: #{tpu_custom_call.1} parent=23 // pred_fallthru
          _
      $region24: #{tpu_custom_call.1} parent=5 // pred_fallthru
        _
      %p154 = scmp.le.s32.totalorder 1, %s15
      %p155 = scmp.lt.s32.totalorder %s15, 3
      %p156 = pnand %p154, %p155
      %p157 = pneg %p156
      // Predicated region
      $region29: #{tpu_custom_call.1} parent=5 // pred_check
        _
      $region30: #{tpu_custom_call.1} parent=5 // pred_check_branch
        %159 = sbr.rel (%p156) target = $region32
      $region31: #{tpu_custom_call.1} parent=5 // pred_region
        %s160 = ssub.s32 %s15, 1
        %s161 = sand.u32 %s28, 1
        %s162 = scalar_lea.sflag [#allocation3], %s161
        %s163 = sand.u32 %s28, 1
        %s164 = smul.addr %s163, 32
        %s165 = scalar_lea.vmem [#allocation2], %s164
        // Predicated region
        $region33: #{tpu_custom_call.1} parent=31 // pred_check
          %p166 = pneg %p41
        $region34: #{tpu_custom_call.1} parent=31 // pred_check_branch
          %168 = sbr.rel (%p166) target = $region36
        $region35: #{tpu_custom_call.1} parent=31 // pred_region
          %169 = dma.done %s162, 512
        $region36: #{tpu_custom_call.1} parent=31 // pred_fallthru
          _
        %s170 = sand.u32 %s28, 1
        %s171 = scalar_lea.sflag [#allocation3], %s170
        %s172 = sand.u32 %s28, 1
        %s173 = smul.addr %s172, 32
        %s174 = scalar_lea.vmem [#allocation2], %s173
        %p175 = pneg %p41
        %p176 = pneg %p38
        %p177 = pneg %p62
        %p178 = pneg %p59
        %p179 = pneg %p83
        %p180 = pneg %p80
        %p181 = pneg %p109
        %p182 = pneg %p106
        %s183 = sand.u32 %s96, 1
        %s184 = scalar_lea.sflag [#allocation4], %s183
        %s185 = sand.u32 %s96, 1
        %s186 = smul.addr %s185, 32
        %s187 = scalar_lea.vmem [#allocation5], %s186
        %v188 = vld [vmem:[%s165] sm:$0xff]
        %v189 = vld [vmem:[%s165 + $0x8] sm:$0xff]
        %v190 = vld [vmem:[%s165 + $0x10] sm:$0xff]
        %v191 = vld [vmem:[%s165 + $0x18] sm:$0x3f]
        %v192 = vld [vmem:[%s1] sm:$0xff]
        %v193 = vld [vmem:[%s1 + $0x8] sm:$0xff]
        %v194 = vld [vmem:[%s1 + $0x10] sm:$0xff]
        %v195 = vld [vmem:[%s1 + $0x18] sm:$0x3f]
        %v196 = vld [vmem:[%s2] sm:$0xff]
        %v197 = vld [vmem:[%s2 + $0x8] sm:$0xff]
        %v198 = vld [vmem:[%s2 + $0x10] sm:$0xff]
        %v199 = vld [vmem:[%s2 + $0x18] sm:$0x3f]
        %201 = vset.pattern.permute.xlu0 0
        %202 = vperm.xlu0 %201, %v196
        %v203 = vpop.permute.xlu0 %202
        %206 = vset.pattern.permute.xlu0 0
        %207 = vperm.xlu0 %206, %v197
        %v208 = vpop.permute.xlu0 %207
        %211 = vset.pattern.permute.xlu0 0
        %212 = vperm.xlu0 %211, %v198
        %v213 = vpop.permute.xlu0 %212
        %216 = vset.pattern.permute.xlu0 0
        %217 = vperm.xlu0 %216, %v199
        %v218 = vpop.permute.xlu0 %217
        %vm220 = vcmask 244736
        %v222 = vsel %vm220, %v192, 0
        %v225 = vsel %vm220, %v193, 0
        %v228 = vsel %vm220, %v194, 0
        %v231 = vsel %vm220, %v195, 0
        %vm233 = vcmask 1045504
        %v235 = vsel %vm233, %v191, 0
        %237 = vmatprep.subr.mxu0 0.0
        %238 = vmatpush1.msra.mxu0 %v188
        %239 = vmatprep.subr.mxu0 0.0
        %240 = vmatpush1.msra.mxu0 %v189
        %241 = vmatprep.subr.mxu0 0.0
        %242 = vmatpush1.msra.mxu0 %v190
        %243 = vmatprep.subr.mxu0 0.0
        %244 = vmatpush1.msra.mxu0 %v235
        %245 = vmatprep.subr.mxu0 0.0
        %246 = vmatpush1.msra.mxu0 0.0
        %247 = vmatprep.subr.mxu0 0.0
        %248 = vmatpush1.msra.mxu0 0.0
        %249 = vmatprep.subr.mxu0 0.0
        %250 = vmatpush1.msra.mxu0 0.0
        %251 = vmatprep.subr.mxu0 0.0
        %252 = vmatpush1.msra.mxu0 0.0
        %253 = vmatprep.subr.mxu0 0.0
        %254 = vmatpush1.msra.mxu0 0.0
        %255 = vmatprep.subr.mxu0 0.0
        %256 = vmatpush1.msra.mxu0 0.0
        %257 = vmatprep.subr.mxu0 0.0
        %258 = vmatpush1.msra.mxu0 0.0
        %259 = vmatprep.subr.mxu0 0.0
        %260 = vmatpush1.msra.mxu0 0.0
        %261 = vmatprep.subr.mxu0 0.0
        %262 = vmatpush1.msra.mxu0 0.0
        %263 = vmatprep.subr.mxu0 0.0
        %264 = vmatpush1.msra.mxu0 0.0
        %265 = vmatprep.subr.mxu0 0.0
        %266 = vmatpush1.msra.mxu0 0.0
        %267 = vmatprep.subr.mxu0 0.0
        %268 = vmatpush1.msra.mxu0 0.0
        %269 = vmatprep.subr.mxu0 0.0
        %270 = vmatpush1.msra.mxu0 0.0
        %271 = vmatprep.subr.mxu0 0.0
        %272 = vmatpush1.msra.mxu0 0.0
        %273 = vmatprep.subr.mxu0 0.0
        %274 = vmatpush1.msra.mxu0 0.0
        %275 = vmatprep.subr.mxu0 0.0
        %276 = vmatpush1.msra.mxu0 0.0
        %277 = vmatprep.subr.mxu0 0.0
        %278 = vmatpush1.msra.mxu0 0.0
        %279 = vmatprep.subr.mxu0 0.0
        %280 = vmatpush1.msra.mxu0 0.0
        %281 = vmatprep.subr.mxu0 0.0
        %282 = vmatpush1.msra.mxu0 0.0
        %283 = vmatprep.subr.mxu0 0.0
        %284 = vmatpush1.msra.mxu0 0.0
        %285 = vmatprep.subr.mxu0 0.0
        %286 = vmatpush1.msra.mxu0 0.0
        %287 = vmatprep.subr.mxu0 0.0
        %288 = vmatpush1.msra.mxu0 0.0
        %289 = vmatprep.subr.mxu0 0.0
        %290 = vmatpush1.msra.mxu0 0.0
        %291 = vmatprep.subr.mxu0 0.0
        %292 = vmatpush1.msra.mxu0 0.0
        %293 = vmatprep.subr.mxu0 0.0
        %294 = vmatpush1.msra.mxu0 0.0
        %295 = vmatprep.subr.mxu0 0.0
        %296 = vmatpush1.msra.mxu0 0.0
        %297 = vmatprep.subr.mxu0 0.0
        %298 = vmatpush1.msra.mxu0 0.0
        %299 = vmatprep.subr.mxu0 0.0
        %300 = vmatpush1.msra.mxu0 0.0
        %301 = vmatprep.mubr.f32.mxu0 0.0
        %302 = vmatmul.mubr.f32.gmra.mrb[0].mxu0 %v222
        %v303 = vpop.f32.mrb[0].mxu0
        %v304 = vadd.f32 %v203, %v303
        %v305 = vpop.f32.mrb[0].mxu0
        %306 = vmatprep.mubr.f32.mxu0 0.0
        %307 = vmatmul.mubr.f32.gmra.mrb[0].mxu0 %v225
        %v308 = vpop.f32.mrb[0].mxu0
        %v309 = vadd.f32 %v208, %v308
        %v310 = vpop.f32.mrb[0].mxu0
        %311 = vmatprep.mubr.f32.mxu0 0.0
        %312 = vmatmul.mubr.f32.gmra.mrb[0].mxu0 %v228
        %v313 = vpop.f32.mrb[0].mxu0
        %v314 = vadd.f32 %v213, %v313
        %v315 = vpop.f32.mrb[0].mxu0
        %316 = vmatprep.mubr.f32.mxu0 0.0
        %317 = vmatmul.mubr.f32.gmra.mrb[0].mxu0 %v231
        %v318 = vpop.f32.mrb[0].mxu0
        %v319 = vadd.f32 %v218, %v318
        %v320 = vpop.f32.mrb[0].mxu0
        %321 = vdwg.mxu0
        %v322 = vsel %vm233, %v319, -inf
        %v323 = vmax.f32 %v304, %v309
        %v324 = vmax.f32 %v314, %v322
        %v325 = vmax.f32 %v323, %v324
        %v326 = vrot.slane %v325, 4
        %v327 = vmax.f32 %v325, %v326
        %v328 = vrot.slane %v327, 2
        %v329 = vmax.f32 %v327, %v328
        %v330 = vrot.slane %v329, 1
        %v331 = vmax.f32 %v329, %v330
        %v332 = vsub.f32 %v304, %v331
        %v333 = vsub.f32 %v309, %v331
        %v334 = vsub.f32 %v314, %v331
        %v335 = vsub.f32 %v319, %v331
        %v336 = vmul.f32 %v332, 1.442695
        %v337 = vpow.pop %v336
        %v338 = vmul.f32 %v333, 1.442695
        %v339 = vpow.pop %v338
        %v340 = vmul.f32 %v334, 1.442695
        %v341 = vpow.pop %v340
        %v342 = vmul.f32 %v335, 1.442695
        %v343 = vpow.pop %v342
        %v344 = vadd.f32 %v337, %v339
        %v345 = vadd.f32 %v344, %v341
        %v346 = vsel %vm233, %v343, 0.0
        %v347 = vadd.f32 %v345, %v346
        %v348 = vrot.slane %v347, 4
        %v349 = vadd.f32 %v347, %v348
        %v350 = vrot.slane %v349, 2
        %v351 = vadd.f32 %v349, %v350
        %v352 = vrot.slane %v351, 1
        %v353 = vadd.f32 %v351, %v352
        %v354 = vrcp.pop %v353
        %v355 = vmul.f32 %v353, %v354
        %v356 = vsub.f32 2.0, %v355
        %v357 = vmul.f32 %v354, %v356
        %v358 = vmul.f32 %v337, %v357
        %v359 = vmul.f32 %v339, %v357
        %v360 = vmul.f32 %v341, %v357
        %v361 = vmul.f32 %v343, %v357
        %v362 = vmul.f32 %v358, %v188
        %v363 = vmul.f32 %v359, %v189
        %v364 = vmul.f32 %v360, %v190
        %v365 = vmul.f32 %v361, %v191
        %366 = vst [vmem:[%s187] sm:$0xff] %v362
        %367 = vst [vmem:[%s187 + $0x8] sm:$0xff] %v363
        %368 = vst [vmem:[%s187 + $0x10] sm:$0xff] %v364
        %369 = vst [vmem:[%s187 + $0x18] sm:$0x3f] %v365
        %s370 = sand.u32 %s96, 1
        %s371 = scalar_lea.sflag [#allocation4], %s370
        %s372 = sand.u32 %s96, 1
        %s373 = smul.addr %s372, 32
        %s374 = scalar_lea.vmem [#allocation5], %s373
        // Predicated region
        $region37: #{tpu_custom_call.1} parent=31 // pred_check
          %p375 = pneg %p106
        $region38: #{tpu_custom_call.1} parent=31 // pred_check_branch
          %377 = sbr.rel (%p375) target = $region40
        $region39: #{tpu_custom_call.1} parent=31 // pred_region
          %s379 = ssub.s32 512, 512
          %380 = vsyncadd %s371, %s379
          %s381 = smul.addr %s20, 128
          %s382 = scalar_lea.hbm %s3, %s381
          %s383 = sshll.u32 %s374, 4
          %s384 = int_to_ptr.vmem [resolvable:$true] %s383
          %389 = dma.vmem_to_hbm [thread:$0]  %s384, 512, %s382, %s371, 128, 256, 8
        $region40: #{tpu_custom_call.1} parent=31 // pred_fallthru
          _
      $region32: #{tpu_custom_call.1} parent=5 // pred_fallthru
        _
      %p390 = scmp.le.s32.totalorder 2, %s15
      // Predicated region
      $region41: #{tpu_custom_call.1} parent=5 // pred_check
        %p391 = pneg %p390
      $region42: #{tpu_custom_call.1} parent=5 // pred_check_branch
        %393 = sbr.rel (%p391) target = $region44
      $region43: #{tpu_custom_call.1} parent=5 // pred_region
        %s394 = ssub.s32 %s15, 2
        // Predicated region
        $region45: #{tpu_custom_call.1} parent=43 // pred_check
          %p395 = pneg %p112
        $region46: #{tpu_custom_call.1} parent=43 // pred_check_branch
          %397 = sbr.rel (%p395) target = $region48
        $region47: #{tpu_custom_call.1} parent=43 // pred_region
          %s398 = sand.u32 %s97, 1
          %s399 = scalar_lea.sflag [#allocation4], %s398
          %s400 = sand.u32 %s97, 1
          %s401 = smul.addr %s400, 32
          %s402 = scalar_lea.vmem [#allocation5], %s401
          %403 = dma.done %s399, 512
        $region48: #{tpu_custom_call.1} parent=43 // pred_fallthru
          _
      $region44: #{tpu_custom_call.1} parent=5 // pred_fallthru
        _
    $region6: #{tpu_custom_call.1} parent=1 // loop_footer
      %s19 = sadd.s32 1, %s15
    $region7: #{tpu_custom_call.1} parent=1 // loop_footer_branch
      %14 = sbr.rel target = $region3
    $region8: #{tpu_custom_call.1} parent=1 // loop_exit
      _
    %404 = vsyncpa [#allocation3], 1
    %s405 = scalar_lea.sflag [#allocation3], 1
    %406 = vsyncpa %s405, 1
    %407 = vsyncpa [#allocation4], 1
    %s408 = scalar_lea.sflag [#allocation4], 1
    %409 = vsyncpa %s408, 1

</llo_original>
